<compile_context>
chip_gen: v7x
topology: tpu7x:2x2x1
jax: 0.10.0
libtpu: 0.0.40
codegen_flags: <defaults>
</compile_context>

<pallas_src>
import functools

import jax
import jax.numpy as jnp
from jax.experimental import pallas as pl
from jax.experimental.pallas import tpu as pltpu

IN_PAD = 8        # packed input lanes:  x(4) | s(1) | 1.0 (bias lane) | 0 | 0
OUT_PAD = 8       # packed output lanes: mu_normed(4) | scale(1) | 0 | 0 | 0
HIDDEN = 256      # MLP hidden width
MU_DIM = 4
ONE_LANE = 5      # input lane that carries the constant 1.0 (b1 folded into w1)
NEG_SLOPE = 0.01  # PyTorch nn.LeakyReLU default


def _leaky_relu(h):
    # max(h, a*h) == LeakyReLU for a < 1: 2 VPU ops (mul, max) instead of 3.
    return jnp.maximum(h, NEG_SLOPE * h)


def mlp_kernel(xin_ref, w1_ref, w2_ref, b2_ref, w3_ref, b3_ref, wh_ref, bh_ref,
               out_ref):
    """One batch tile of the full forward pass.

    xin_ref : (T, 8) f32   [x(4) | s(1) | 1.0 | 0 | 0]
    w1      : (8, 256) f32 with b1 folded into row ONE_LANE (layer-1 stays f32,
              its K=8 matmul is essentially free on the MXU).
    w2/w3/wh: matmul-operand dtype (bf16 recommended); b2/b3: activation dtype;
              bh: f32.  wh/bh fuse the mu (lanes 0-3) and scale (lane 4) heads.
    out_ref : (T, 8) f32   [mu_normed(4) | softplus(scale)+1e-3 | 0 | 0 | 0]
    """
    cdt = w2_ref.dtype          # MXU operand dtype (bf16 or f32)
    adt = b2_ref.dtype          # elementwise/activation dtype (bf16 on v6e/v7x, f32 on v5e)
    xin = xin_ref[...]          # residual branch stays f32

    # Layer 1: f32 operands, b1 already folded in via the constant-1 input lane.
    h = _leaky_relu(
        jnp.dot(xin, w1_ref[...], preferred_element_type=jnp.float32).astype(adt))
    # Layers 2-3: bf16 MXU operands; bias-add + LeakyReLU in the activation dtype.
    h = _leaky_relu(
        jnp.dot(h.astype(cdt), w2_ref[...],
                preferred_element_type=jnp.float32).astype(adt) + b2_ref[...])
    h = _leaky_relu(
        jnp.dot(h.astype(cdt), w3_ref[...],
                preferred_element_type=jnp.float32).astype(adt) + b3_ref[...])

    # Fused heads (f32 epilogue): lanes 0-3 = mu linear, lane 4 = scale linear.
    head = (jnp.dot(h.astype(cdt), wh_ref[...],
                    preferred_element_type=jnp.float32) + bh_ref[...])

    lane = jax.lax.broadcasted_iota(jnp.int32, head.shape, dimension=1)
    mu_mask = lane < MU_DIM

    # Residual x from the input tile's first 4 lanes; lanes >= 4 never leak into mu.
    mu = jnp.where(mu_mask, head + xin, 0.0)
    inv_norm = jax.lax.rsqrt(jnp.sum(mu * mu, axis=-1, keepdims=True) + 1e-12)
    mu_normed = mu * inv_norm                   # already zero in lanes >= 4
    scale = jax.nn.softplus(head) + 0.001       # only lane 4 is meaningful

    out_ref[...] = mu_normed + jnp.where(lane == MU_DIM, scale, 0.0)


def _round_up(n, m):
    return ((n + m - 1) // m) * m


def _cdiv(a, b):
    return -(-a // b)


def pack_params(params, compute_dtype=jnp.bfloat16, act_dtype=jnp.float32):
    """One-time padding / bias-folding / head-fusion / casting of the PyTorch params.

    compute_dtype: dtype of the 256-wide matmul operands (bf16 on all current TPUs).
    act_dtype:     dtype of the hidden bias-add / LeakyReLU chain
                   (bf16 on v6e/v7x which have a bf16 VALU, f32 on v5e).
    """
    f32 = jnp.float32
    in_dim = params["w1"].shape[0]                 # 5
    assert in_dim <= ONE_LANE < IN_PAD
    w1 = jnp.zeros((IN_PAD, HIDDEN), f32)
    w1 = w1.at[:in_dim, :].set(params["w1"].astype(f32))
    w1 = w1.at[ONE_LANE, :].set(params["b1"].astype(f32))   # b1 folded: input lane == 1.0

    wh = jnp.concatenate(
        [params["wmu"], params["wsc"],
         jnp.zeros((HIDDEN, OUT_PAD - MU_DIM - 1), f32)], axis=1)
    bh = jnp.concatenate(
        [params["bmu"], params["bsc"],
         jnp.zeros((OUT_PAD - MU_DIM - 1,), f32)])[None, :]

    return dict(
        w1=w1,
        w2=params["w2"].astype(compute_dtype), b2=params["b2"][None, :].astype(act_dtype),
        w3=params["w3"].astype(compute_dtype), b3=params["b3"][None, :].astype(act_dtype),
        wh=wh.astype(compute_dtype), bh=bh.astype(f32))


def recommended_dtypes():
    """bf16 MXU operands everywhere; bf16 elementwise only where the VALU has a bf16 path."""
    kind = jax.devices()[0].device_kind.lower()
    bf16_valu = ("v6" in kind) or ("7" in kind)       # v6e / v7x
    return jnp.bfloat16, (jnp.bfloat16 if bf16_valu else jnp.float32)


@functools.partial(jax.jit, static_argnames=("tile_b",))
def simple_mlp_forward(x, s, packed, *, tile_b=2048):
    """x: (B, 4), s: (B, 1) -> (mu_normed (B, 4) f32, scale (B, 1) f32)."""
    B = x.shape[0]
    # Balanced, sublane-aligned batch tiles; >= 2 grid steps when possible so both
    # v7x TensorCores get work via the "parallel" batch axis.
    n_tiles = max(_cdiv(B, tile_b), 2 if B >= 16 else 1)
    tb = _round_up(_cdiv(B, n_tiles), 8)
    Bp = tb * n_tiles

    # Pack [x | s | 1] into 8 lanes with a single concatenate + pad (no scatter).
    xin = jnp.concatenate(
        [x.astype(jnp.float32), s.astype(jnp.float32),
         jnp.ones((B, 1), jnp.float32)], axis=-1)
    xin = jnp.pad(xin, ((0, Bp - B), (0, IN_PAD - (MU_DIM + 2))))

    def _const(shape):   # same block every grid step -> stays VMEM-resident
        return pl.BlockSpec(shape, lambda i: (0, 0))

    out = pl.pallas_call(
        mlp_kernel,
        out_shape=jax.ShapeDtypeStruct((Bp, OUT_PAD), jnp.float32),
        grid=(n_tiles,),
        in_specs=[
            pl.BlockSpec((tb, IN_PAD), lambda i: (i, 0)),
            _const((IN_PAD, HIDDEN)),
            _const((HIDDEN, HIDDEN)), _const((1, HIDDEN)),
            _const((HIDDEN, HIDDEN)), _const((1, HIDDEN)),
            _const((HIDDEN, OUT_PAD)), _const((1, OUT_PAD)),
        ],
        out_specs=pl.BlockSpec((tb, OUT_PAD), lambda i: (i, 0)),
        compiler_params=pltpu.CompilerParams(
            dimension_semantics=("parallel",)),
    )(xin, packed["w1"], packed["w2"], packed["b2"],
      packed["w3"], packed["b3"], packed["wh"], packed["bh"])

    return out[:B, :MU_DIM], out[:B, MU_DIM:MU_DIM + 1]


def init_params(key, input_size=5):
    """Deterministic init mimicking PyTorch nn.Linear defaults (U[-1/sqrt(fan_in), ...])."""
    def linear(k, fan_in, fan_out):
        kw, kb = jax.random.split(k)
        bound = 1.0 / jnp.sqrt(float(fan_in))
        w = jax.random.uniform(kw, (fan_in, fan_out), jnp.float32, -bound, bound)
        b = jax.random.uniform(kb, (fan_out,), jnp.float32, -bound, bound)
        return w, b

    k1, k2, k3, k4, k5 = jax.random.split(key, 5)
    w1, b1 = linear(k1, input_size, HIDDEN)
    w2, b2 = linear(k2, HIDDEN, HIDDEN)
    w3, b3 = linear(k3, HIDDEN, HIDDEN)
    wmu, bmu = linear(k4, HIDDEN, 4)
    wsc, bsc = linear(k5, HIDDEN, 1)
    return dict(w1=w1, b1=b1, w2=w2, b2=b2, w3=w3, b3=b3,
                wmu=wmu, bmu=bmu, wsc=wsc, bsc=bsc)


def reference_forward(x, s, p):
    """Pure-JAX f32 reference of the PyTorch module."""
    concat = jnp.concatenate([x, s], axis=-1)
    h = _leaky_relu(concat @ p["w1"] + p["b1"])
    h = _leaky_relu(h @ p["w2"] + p["b2"])
    h = _leaky_relu(h @ p["w3"] + p["b3"])
    mu = h @ p["wmu"] + p["bmu"] + x
    mu_normed = mu / (jnp.linalg.norm(mu, axis=-1, keepdims=True) + 1e-7)
    scale = jax.nn.softplus(h @ p["wsc"] + p["bsc"]) + 0.001
    return mu_normed, scale


if __name__ == "__main__":
    key = jax.random.PRNGKey(0)
    kp, kx, ks = jax.random.split(key, 3)
    params = init_params(kp)

    def make_inputs(kx_, ks_, B):
        # x plays the role of (noised) unit quaternions in the demo; s is a noise scale.
        x_ = jax.random.normal(kx_, (B, 4), jnp.float32)
        x_ = x_ / jnp.linalg.norm(x_, axis=-1, keepdims=True)
        s_ = jnp.sqrt(0.01 + jax.random.uniform(ks_, (B, 1), jnp.float32))
        return x_, s_

    # --- small-shape check (B = 8) ---
    x, s = make_inputs(kx, ks, 8)
    mu_ref, sc_ref = reference_forward(x, s, params)

    # All-f32 path: only the rsqrt-epsilon / accumulation order differs from the reference.
    p_f32 = pack_params(params, jnp.float32, jnp.float32)
    mu0, sc0 = simple_mlp_forward(x, s, p_f32, tile_b=256)
    jax.block_until_ready((mu0, sc0))
    assert mu0.shape == (8, 4) and sc0.shape == (8, 1)
    assert jnp.allclose(mu0, mu_ref, atol=1e-2, rtol=1e-2)
    assert jnp.allclose(sc0, sc_ref, atol=1e-2, rtol=1e-2)

    # bf16 MXU operands, f32 elementwise (v5e policy).
    p_b16_f32 = pack_params(params, jnp.bfloat16, jnp.float32)
    mu1, sc1 = simple_mlp_forward(x, s, p_b16_f32, tile_b=256)
    jax.block_until_ready((mu1, sc1))
    assert jnp.allclose(mu1, mu_ref, atol=8e-2, rtol=8e-2)
    assert jnp.allclose(sc1, sc_ref, atol=8e-2, rtol=8e-2)

    # bf16 MXU operands + bf16 activation chain (v6e / v7x policy).
    p_b16_b16 = pack_params(params, jnp.bfloat16, jnp.bfloat16)
    mu2, sc2 = simple_mlp_forward(x, s, p_b16_b16, tile_b=256)
    jax.block_until_ready((mu2, sc2))
    assert jnp.allclose(mu2, mu_ref, atol=8e-2, rtol=8e-2)
    assert jnp.allclose(sc2, sc_ref, atol=8e-2, rtol=8e-2)

    # --- multi-tile pipelined grid with a non-divisible batch (balanced tiling) ---
    cdt, adt = recommended_dtypes()
    p_rec = pack_params(params, cdt, adt)
    kx2, ks2 = jax.random.split(key)
    xb, sb = make_inputs(kx2, ks2, 300)
    mu_b, sc_b = simple_mlp_forward(xb, sb, p_rec, tile_b=128)   # grid=(3,), tb=104
    jax.block_until_ready((mu_b, sc_b))
    mu_bref, sc_bref = reference_forward(xb, sb, params)
    assert mu_b.shape == (300, 4) and sc_b.shape == (300, 1)
    assert jnp.allclose(mu_b, mu_bref, atol=8e-2, rtol=8e-2)
    assert jnp.allclose(sc_b, sc_bref, atol=8e-2, rtol=8e-2)

    print("KERNEL_OK")
</pallas_src>

<mosaic_0001>
module attributes {stable_mosaic.version = 11 : i64} {
  func.func @mlp_kernel(%arg0: i32, %arg1: memref<8x8xf32, #tpu.memory_space<vmem>>, %arg2: memref<8x256xf32, #tpu.memory_space<vmem>>, %arg3: memref<256x256xf32, #tpu.memory_space<vmem>>, %arg4: memref<1x256xf32, #tpu.memory_space<vmem>>, %arg5: memref<256x256xf32, #tpu.memory_space<vmem>>, %arg6: memref<1x256xf32, #tpu.memory_space<vmem>>, %arg7: memref<256x8xf32, #tpu.memory_space<vmem>>, %arg8: memref<1x8xf32, #tpu.memory_space<vmem>>, %arg9: memref<8x8xf32, #tpu.memory_space<vmem>>) attributes {dimension_semantics = [#tpu.dimension_semantics<parallel>], iteration_bounds = array<i64: 1>, scalar_prefetch = 0 : i64, scratch_operands = 0 : i64, tpu.core_type = #tpu.core_type<tc>, window_params = [{transform_indices = @transform_0, window_bounds = array<i64: 8, 8>}, {pipeline_mode = #tpu.pipeline_mode<synchronous>, transform_indices = @transform_1, window_bounds = array<i64: 8, 256>}, {pipeline_mode = #tpu.pipeline_mode<synchronous>, transform_indices = @transform_2, window_bounds = array<i64: 256, 256>}, {pipeline_mode = #tpu.pipeline_mode<synchronous>, transform_indices = @transform_3, window_bounds = array<i64: 1, 256>}, {pipeline_mode = #tpu.pipeline_mode<synchronous>, transform_indices = @transform_4, window_bounds = array<i64: 256, 256>}, {pipeline_mode = #tpu.pipeline_mode<synchronous>, transform_indices = @transform_5, window_bounds = array<i64: 1, 256>}, {pipeline_mode = #tpu.pipeline_mode<synchronous>, transform_indices = @transform_6, window_bounds = array<i64: 256, 8>}, {pipeline_mode = #tpu.pipeline_mode<synchronous>, transform_indices = @transform_7, window_bounds = array<i64: 1, 8>}, {transform_indices = @transform_8, window_bounds = array<i64: 8, 8>}]} {
    %c0 = arith.constant 0 : index
    %c0_0 = arith.constant 0 : index
    %0 = vector.load %arg1[%c0, %c0_0] : memref<8x8xf32, #tpu.memory_space<vmem>>, vector<8x8xf32>
    %c0_1 = arith.constant 0 : index
    %c0_2 = arith.constant 0 : index
    %1 = vector.load %arg2[%c0_1, %c0_2] : memref<8x256xf32, #tpu.memory_space<vmem>>, vector<8x256xf32>
    %cst = arith.constant dense<0.000000e+00> : vector<8x256xf32>
    %2 = tpu.matmul %0, %1, %cst {dimension_numbers = #tpu.dot_dimension_numbers<[1], [0], [0], [1], [0, 0, 1, 1], [], []>} : vector<8x8xf32>, vector<8x256xf32>, vector<8x256xf32> -> vector<8x256xf32>
    %cst_3 = arith.constant 0.00999999977 : f32
    %3 = vector.broadcast %cst_3 : f32 to vector<8x256xf32>
    %4 = arith.mulf %3, %2 : vector<8x256xf32>
    %5 = arith.maximumf %2, %4 : vector<8x256xf32>
    %c0_4 = arith.constant 0 : index
    %c0_5 = arith.constant 0 : index
    %6 = vector.load %arg3[%c0_4, %c0_5] : memref<256x256xf32, #tpu.memory_space<vmem>>, vector<256x256xf32>
    %cst_6 = arith.constant dense<0.000000e+00> : vector<8x256xf32>
    %7 = tpu.matmul %5, %6, %cst_6 {dimension_numbers = #tpu.dot_dimension_numbers<[1], [0], [0], [1], [0, 0, 1, 1], [], []>} : vector<8x256xf32>, vector<256x256xf32>, vector<8x256xf32> -> vector<8x256xf32>
    %c0_7 = arith.constant 0 : index
    %c0_8 = arith.constant 0 : index
    %8 = vector.load %arg4[%c0_7, %c0_8] : memref<1x256xf32, #tpu.memory_space<vmem>>, vector<1x256xf32>
    %9 = vector.broadcast %8 : vector<1x256xf32> to vector<8x256xf32>
    %10 = arith.addf %7, %9 : vector<8x256xf32>
    %cst_9 = arith.constant 0.00999999977 : f32
    %11 = vector.broadcast %cst_9 : f32 to vector<8x256xf32>
    %12 = arith.mulf %11, %10 : vector<8x256xf32>
    %13 = arith.maximumf %10, %12 : vector<8x256xf32>
    %c0_10 = arith.constant 0 : index
    %c0_11 = arith.constant 0 : index
    %14 = vector.load %arg5[%c0_10, %c0_11] : memref<256x256xf32, #tpu.memory_space<vmem>>, vector<256x256xf32>
    %cst_12 = arith.constant dense<0.000000e+00> : vector<8x256xf32>
    %15 = tpu.matmul %13, %14, %cst_12 {dimension_numbers = #tpu.dot_dimension_numbers<[1], [0], [0], [1], [0, 0, 1, 1], [], []>} : vector<8x256xf32>, vector<256x256xf32>, vector<8x256xf32> -> vector<8x256xf32>
    %c0_13 = arith.constant 0 : index
    %c0_14 = arith.constant 0 : index
    %16 = vector.load %arg6[%c0_13, %c0_14] : memref<1x256xf32, #tpu.memory_space<vmem>>, vector<1x256xf32>
    %17 = vector.broadcast %16 : vector<1x256xf32> to vector<8x256xf32>
    %18 = arith.addf %15, %17 : vector<8x256xf32>
    %cst_15 = arith.constant 0.00999999977 : f32
    %19 = vector.broadcast %cst_15 : f32 to vector<8x256xf32>
    %20 = arith.mulf %19, %18 : vector<8x256xf32>
    %21 = arith.maximumf %18, %20 : vector<8x256xf32>
    %c0_16 = arith.constant 0 : index
    %c0_17 = arith.constant 0 : index
    %22 = vector.load %arg7[%c0_16, %c0_17] : memref<256x8xf32, #tpu.memory_space<vmem>>, vector<256x8xf32>
    %cst_18 = arith.constant dense<0.000000e+00> : vector<8x8xf32>
    %23 = tpu.matmul %21, %22, %cst_18 {dimension_numbers = #tpu.dot_dimension_numbers<[1], [0], [0], [1], [0, 0, 1, 1], [], []>} : vector<8x256xf32>, vector<256x8xf32>, vector<8x8xf32> -> vector<8x8xf32>
    %c0_19 = arith.constant 0 : index
    %c0_20 = arith.constant 0 : index
    %24 = vector.load %arg8[%c0_19, %c0_20] : memref<1x8xf32, #tpu.memory_space<vmem>>, vector<1x8xf32>
    %25 = vector.broadcast %24 : vector<1x8xf32> to vector<8x8xf32>
    %26 = arith.addf %23, %25 : vector<8x8xf32>
    %27 = tpu.iota {dimensions = array<i32: 1>} : vector<8x8xi32>
    %c4_i32 = arith.constant 4 : i32
    %28 = vector.broadcast %c4_i32 : i32 to vector<8x8xi32>
    %29 = arith.cmpi slt, %27, %28 : vector<8x8xi32>
    %30 = arith.addf %26, %0 : vector<8x8xf32>
    %cst_21 = arith.constant 0.000000e+00 : f32
    %31 = vector.broadcast %cst_21 : f32 to vector<8x8xf32>
    %32 = arith.select %29, %30, %31 : vector<8x8xi1>, vector<8x8xf32>
    %33 = arith.mulf %32, %32 : vector<8x8xf32>
    %cst_22 = arith.constant dense<0.000000e+00> : vector<8xf32>
    %34 = vector.multi_reduction <add>, %33, %cst_22 [1] : vector<8x8xf32> to vector<8xf32>
    %35 = vector.shape_cast %34 : vector<8xf32> to vector<8x1xf32>
    %cst_23 = arith.constant 9.99999996E-13 : f32
    %36 = vector.broadcast %cst_23 : f32 to vector<8x1xf32>
    %37 = arith.addf %35, %36 : vector<8x1xf32>
    %38 = math.rsqrt %37 : vector<8x1xf32>
    %39 = vector.broadcast %38 : vector<8x1xf32> to vector<8x8xf32>
    %40 = arith.mulf %32, %39 : vector<8x8xf32>
    %cst_24 = arith.constant 0.000000e+00 : f32
    %41 = vector.broadcast %cst_24 : f32 to vector<8x8xf32>
    %42 = arith.maximumf %26, %41 : vector<8x8xf32>
    %43 = vector.broadcast %cst_24 : f32 to vector<8x8xf32>
    %44 = arith.subf %26, %43 : vector<8x8xf32>
    %45 = arith.cmpf one, %44, %44 : vector<8x8xf32>
    %46 = vector.broadcast %cst_24 : f32 to vector<8x8xf32>
    %47 = arith.addf %26, %46 : vector<8x8xf32>
    %48 = math.absf %44 : vector<8x8xf32>
    %cst_25 = arith.constant 0.000000e+00 : f32
    %49 = vector.broadcast %cst_25 : f32 to vector<8x8xf32>
    %50 = arith.subf %49, %48 : vector<8x8xf32>
    %51 = math.exp %50 : vector<8x8xf32>
    %52 = math.log1p %51 : vector<8x8xf32>
    %53 = arith.addf %42, %52 : vector<8x8xf32>
    %54 = arith.select %45, %47, %53 : vector<8x8xi1>, vector<8x8xf32>
    %cst_26 = arith.constant 1.000000e-03 : f32
    %55 = vector.broadcast %cst_26 : f32 to vector<8x8xf32>
    %56 = arith.addf %54, %55 : vector<8x8xf32>
    %c4_i32_27 = arith.constant 4 : i32
    %57 = vector.broadcast %c4_i32_27 : i32 to vector<8x8xi32>
    %58 = arith.cmpi eq, %27, %57 : vector<8x8xi32>
    %cst_28 = arith.constant 0.000000e+00 : f32
    %59 = vector.broadcast %cst_28 : f32 to vector<8x8xf32>
    %60 = arith.select %58, %56, %59 : vector<8x8xi1>, vector<8x8xf32>
    %61 = arith.addf %40, %60 : vector<8x8xf32>
    %c0_29 = arith.constant 0 : index
    %c0_30 = arith.constant 0 : index
    %62 = vector.load %arg9[%c0_29, %c0_30] : memref<8x8xf32, #tpu.memory_space<vmem>>, vector<8x8xf32>
    tpu.vector_store %arg9[%c0_29, %c0_30], %61 {strides = array<i32>} : memref<8x8xf32, #tpu.memory_space<vmem>>, vector<8x8xf32>,
    return
  }
  func.func @transform_0(%arg0: i32) -> (i32, i32) {
    %c0_i32 = arith.constant 0 : i32
    %c0_i32_0 = arith.constant 0 : i32
    return %arg0, %c0_i32 : i32, i32
  }
  func.func @transform_1(%arg0: i32) -> (i32, i32) {
    %c0_i32 = arith.constant 0 : i32
    %c0_i32_0 = arith.constant 0 : i32
    %c0_i32_1 = arith.constant 0 : i32
    return %c0_i32, %c0_i32_0 : i32, i32
  }
  func.func @transform_2(%arg0: i32) -> (i32, i32) {
    %c0_i32 = arith.constant 0 : i32
    %c0_i32_0 = arith.constant 0 : i32
    %c0_i32_1 = arith.constant 0 : i32
    return %c0_i32, %c0_i32_0 : i32, i32
  }
  func.func @transform_3(%arg0: i32) -> (i32, i32) {
    %c0_i32 = arith.constant 0 : i32
    %c0_i32_0 = arith.constant 0 : i32
    %c0_i32_1 = arith.constant 0 : i32
    return %c0_i32, %c0_i32_0 : i32, i32
  }
  func.func @transform_4(%arg0: i32) -> (i32, i32) {
    %c0_i32 = arith.constant 0 : i32
    %c0_i32_0 = arith.constant 0 : i32
    %c0_i32_1 = arith.constant 0 : i32
    return %c0_i32, %c0_i32_0 : i32, i32
  }
  func.func @transform_5(%arg0: i32) -> (i32, i32) {
    %c0_i32 = arith.constant 0 : i32
    %c0_i32_0 = arith.constant 0 : i32
    %c0_i32_1 = arith.constant 0 : i32
    return %c0_i32, %c0_i32_0 : i32, i32
  }
  func.func @transform_6(%arg0: i32) -> (i32, i32) {
    %c0_i32 = arith.constant 0 : i32
    %c0_i32_0 = arith.constant 0 : i32
    %c0_i32_1 = arith.constant 0 : i32
    return %c0_i32, %c0_i32_0 : i32, i32
  }
  func.func @transform_7(%arg0: i32) -> (i32, i32) {
    %c0_i32 = arith.constant 0 : i32
    %c0_i32_0 = arith.constant 0 : i32
    %c0_i32_1 = arith.constant 0 : i32
    return %c0_i32, %c0_i32_0 : i32, i32
  }
  func.func @transform_8(%arg0: i32) -> (i32, i32) {
    %c0_i32 = arith.constant 0 : i32
    %c0_i32_0 = arith.constant 0 : i32
    return %arg0, %c0_i32 : i32, i32
  }
}

</mosaic_0001>

<llo_original>
// kernel: simple_mlp_forward.1
$region0: #{simple_mlp_forward.1}
  #allocation0 [shape = 'u32[]', space=smem, size = 0x4, offset = 0x4, fixed_abs, tag = 'smem constant byte address 0x4 - core index']
  #allocation1 [shape = 'u32[144,128]{1,0:T(1,128)}', space=vmem, size = 0x12000, scoped, tag = 'internal scratch']
  %s0 = inlined_call_operand.vmem [shape: f32[8,8], index: 0, kind: input, shape index: {}]
  %s1 = inlined_call_operand.vmem [shape: f32[8,256], index: 1, kind: input, shape index: {}]
  %s2 = inlined_call_operand.hbm [shape: f32[256,256], index: 2, kind: input, shape index: {}]
  %s3 = inlined_call_operand.vmem [shape: f32[1,256], index: 3, kind: input, shape index: {}]
  %s4 = inlined_call_operand.hbm [shape: f32[256,256], index: 4, kind: input, shape index: {}]
  %s5 = inlined_call_operand.vmem [shape: f32[1,256], index: 5, kind: input, shape index: {}]
  %s6 = inlined_call_operand.vmem [shape: f32[256,8], index: 6, kind: input, shape index: {}]
  %s7 = inlined_call_operand.vmem [shape: f32[1,8], index: 7, kind: input, shape index: {}]
  %s8 = inlined_call_operand.vmem [shape: f32[8,8], index: 8, kind: output, shape index: {}]
  %s9 = sld [smem:[#allocation0]]
  $region50: #{simple_mlp_forward.1} parent=0
    _
  %s11 = ssub.s32 1, %s9
  %s12 = scalar_select 0, %s11, %s9
  $region1: #{simple_mlp_forward.1} parent=0
    #allocation2 [shape = 'u8[262144]{0}', space=vmem, size = 0x40000, scoped, tag = 'input window, operand 2, single buffered']
    #allocation3 [shape = 's32[1]{0}', space=sflag, size = 0x4, scoped, tag = 'scoped memory for simple_mlp_forward.1']
    #allocation4 [shape = 'u8[262144]{0}', space=vmem, size = 0x40000, scoped, tag = 'input window, operand 4, single buffered']
    #allocation5 [shape = 's32[1]{0}', space=sflag, size = 0x4, scoped, tag = 'scoped memory for simple_mlp_forward.1']
    %13 = vsyncpa [#allocation3], 0
    %14 = vsyncpa [#allocation5], 0
    // Predicated region
    $region2: #{simple_mlp_forward.1} parent=1 // pred_check
      _
    $region3: #{simple_mlp_forward.1} parent=1 // pred_check_branch
      %16 = sbr.rel (0) target = $region5
    $region4: #{simple_mlp_forward.1} parent=1 // pred_region
      _
    $region5: #{simple_mlp_forward.1} parent=1 // pred_fallthru
      _
    // Predicated region
    $region6: #{simple_mlp_forward.1} parent=1 // pred_check
      _
    $region7: #{simple_mlp_forward.1} parent=1 // pred_check_branch
      %18 = sbr.rel (0) target = $region9
    $region8: #{simple_mlp_forward.1} parent=1 // pred_region
      _
    $region9: #{simple_mlp_forward.1} parent=1 // pred_fallthru
      _
    // Predicated region
    $region10: #{simple_mlp_forward.1} parent=1 // pred_check
      _
    $region11: #{simple_mlp_forward.1} parent=1 // pred_check_branch
      %20 = sbr.rel (0) target = $region13
    $region12: #{simple_mlp_forward.1} parent=1 // pred_region
      %s22 = ssub.s32 8192, 8192
      %23 = vsyncadd [#allocation3], %s22
      %s24 = sshll.u32 [#allocation2], 4
      %s25 = int_to_ptr.vmem [resolvable:$true] %s24
      %30 = dma.hbm_to_vmem [thread:$0]  %s2, 8192, %s25, [#allocation3], 256, 256, 16
    $region13: #{simple_mlp_forward.1} parent=1 // pred_fallthru
      _
    // Predicated region
    $region14: #{simple_mlp_forward.1} parent=1 // pred_check
      _
    $region15: #{simple_mlp_forward.1} parent=1 // pred_check_branch
      %32 = sbr.rel (0) target = $region17
    $region16: #{simple_mlp_forward.1} parent=1 // pred_region
      _
    $region17: #{simple_mlp_forward.1} parent=1 // pred_fallthru
      _
    // Predicated region
    $region18: #{simple_mlp_forward.1} parent=1 // pred_check
      _
    $region19: #{simple_mlp_forward.1} parent=1 // pred_check_branch
      %34 = sbr.rel (0) target = $region21
    $region20: #{simple_mlp_forward.1} parent=1 // pred_region
      %s36 = ssub.s32 8192, 8192
      %37 = vsyncadd [#allocation5], %s36
      %s38 = sshll.u32 [#allocation4], 4
      %s39 = int_to_ptr.vmem [resolvable:$true] %s38
      %44 = dma.hbm_to_vmem [thread:$0]  %s4, 8192, %s39, [#allocation5], 256, 256, 16
    $region21: #{simple_mlp_forward.1} parent=1 // pred_fallthru
      _
    // Predicated region
    $region22: #{simple_mlp_forward.1} parent=1 // pred_check
      _
    $region23: #{simple_mlp_forward.1} parent=1 // pred_check_branch
      %46 = sbr.rel (0) target = $region25
    $region24: #{simple_mlp_forward.1} parent=1 // pred_region
      _
    $region25: #{simple_mlp_forward.1} parent=1 // pred_fallthru
      _
    // Predicated region
    $region26: #{simple_mlp_forward.1} parent=1 // pred_check
      _
    $region27: #{simple_mlp_forward.1} parent=1 // pred_check_branch
      %48 = sbr.rel (0) target = $region29
    $region28: #{simple_mlp_forward.1} parent=1 // pred_region
      _
    $region29: #{simple_mlp_forward.1} parent=1 // pred_fallthru
      _
    // Predicated region
    $region30: #{simple_mlp_forward.1} parent=1 // pred_check
      _
    $region31: #{simple_mlp_forward.1} parent=1 // pred_check_branch
      %50 = sbr.rel (0) target = $region33
    $region32: #{simple_mlp_forward.1} parent=1 // pred_region
      _
    $region33: #{simple_mlp_forward.1} parent=1 // pred_fallthru
      _
    // Predicated region
    $region34: #{simple_mlp_forward.1} parent=1 // pred_check
      _
    $region35: #{simple_mlp_forward.1} parent=1 // pred_check_branch
      %52 = sbr.rel (0) target = $region37
    $region36: #{simple_mlp_forward.1} parent=1 // pred_region
      %53 = dma.done [#allocation3], 8192
    $region37: #{simple_mlp_forward.1} parent=1 // pred_fallthru
      _
    // Predicated region
    $region38: #{simple_mlp_forward.1} parent=1 // pred_check
      _
    $region39: #{simple_mlp_forward.1} parent=1 // pred_check_branch
      %55 = sbr.rel (0) target = $region41
    $region40: #{simple_mlp_forward.1} parent=1 // pred_region
      %56 = dma.done [#allocation5], 8192
    $region41: #{simple_mlp_forward.1} parent=1 // pred_fallthru
      _
    %v57 = vld [vmem:[%s0] sm:$0xff]
    %v58 = vld [vmem:[%s1] sm:$0xff]
    %v59 = vld [vmem:[%s1 + $0x8] sm:$0xff]
    %vm60 = vcmask 64512
    %v62 = vsel %vm60, %v57, 0
    %64 = vmatprep.subr.mxu0 %v59
    %65 = vmatpush1.msra.mxu0 %v58
    %66 = vmatprep.subr.mxu0 0.0
    %67 = vmatpush1.msra.mxu0 0.0
    %68 = vmatprep.subr.mxu0 0.0
    %69 = vmatpush1.msra.mxu0 0.0
    %70 = vmatprep.subr.mxu0 0.0
    %71 = vmatpush1.msra.mxu0 0.0
    %72 = vmatprep.subr.mxu0 0.0
    %73 = vmatpush1.msra.mxu0 0.0
    %74 = vmatprep.subr.mxu0 0.0
    %75 = vmatpush1.msra.mxu0 0.0
    %76 = vmatprep.subr.mxu0 0.0
    %77 = vmatpush1.msra.mxu0 0.0
    %78 = vmatprep.subr.mxu0 0.0
    %79 = vmatpush1.msra.mxu0 0.0
    %80 = vmatprep.subr.mxu0 0.0
    %81 = vmatpush1.msra.mxu0 0.0
    %82 = vmatprep.subr.mxu0 0.0
    %83 = vmatpush1.msra.mxu0 0.0
    %84 = vmatprep.subr.mxu0 0.0
    %85 = vmatpush1.msra.mxu0 0.0
    %86 = vmatprep.subr.mxu0 0.0
    %87 = vmatpush1.msra.mxu0 0.0
    %88 = vmatprep.subr.mxu0 0.0
    %89 = vmatpush1.msra.mxu0 0.0
    %90 = vmatprep.subr.mxu0 0.0
    %91 = vmatpush1.msra.mxu0 0.0
    %92 = vmatprep.subr.mxu0 0.0
    %93 = vmatpush1.msra.mxu0 0.0
    %94 = vmatprep.subr.mxu0 0.0
    %95 = vmatpush1.msra.mxu0 0.0
    %96 = vmatprep.subr.mxu0 0.0
    %97 = vmatpush1.msra.mxu0 0.0
    %98 = vmatprep.subr.mxu0 0.0
    %99 = vmatpush1.msra.mxu0 0.0
    %100 = vmatprep.subr.mxu0 0.0
    %101 = vmatpush1.msra.mxu0 0.0
    %102 = vmatprep.subr.mxu0 0.0
    %103 = vmatpush1.msra.mxu0 0.0
    %104 = vmatprep.subr.mxu0 0.0
    %105 = vmatpush1.msra.mxu0 0.0
    %106 = vmatprep.subr.mxu0 0.0
    %107 = vmatpush1.msra.mxu0 0.0
    %108 = vmatprep.subr.mxu0 0.0
    %109 = vmatpush1.msra.mxu0 0.0
    %110 = vmatprep.subr.mxu0 0.0
    %111 = vmatpush1.msra.mxu0 0.0
    %112 = vmatprep.subr.mxu0 0.0
    %113 = vmatpush1.msra.mxu0 0.0
    %114 = vmatprep.subr.mxu0 0.0
    %115 = vmatpush1.msra.mxu0 0.0
    %116 = vmatprep.subr.mxu0 0.0
    %117 = vmatpush1.msra.mxu0 0.0
    %118 = vmatprep.subr.mxu0 0.0
    %119 = vmatpush1.msra.mxu0 0.0
    %120 = vmatprep.subr.mxu0 0.0
    %121 = vmatpush1.msra.mxu0 0.0
    %122 = vmatprep.subr.mxu0 0.0
    %123 = vmatpush1.msra.mxu0 0.0
    %124 = vmatprep.subr.mxu0 0.0
    %125 = vmatpush1.msra.mxu0 0.0
    %126 = vmatprep.subr.mxu0 0.0
    %127 = vmatpush1.msra.mxu0 0.0
    %128 = vmatprep.mubr.f32.mxu0 0.0
    %129 = vmatmul.mubr.f32.gmra.mrb[0].mxu0 %v62
    %v130 = vpop.f32.mrb[0].mxu0
    %v131 = vadd.f32 0.0, %v130
    %v132 = vpop.f32.mrb[0].mxu0
    %v133 = vadd.f32 0.0, %v132
    %134 = vdwg.mxu0
    %v135 = vmul.f32 %v131, 0.01
    %v136 = vmul.f32 %v133, 0.01
    %v137 = vmax.f32 %v131, %v135
    %v138 = vmax.f32 %v133, %v136
    %v139 = vld [vmem:[#allocation2] sm:$0xff]
    %v140 = vld [vmem:[#allocation2 + $0x8] sm:$0xff]
    %v141 = vld [vmem:[#allocation2 + $0x10] sm:$0xff]
    %v142 = vld [vmem:[#allocation2 + $0x18] sm:$0xff]
    %v143 = vld [vmem:[#allocation2 + $0x20] sm:$0xff]
    %v144 = vld [vmem:[#allocation2 + $0x28] sm:$0xff]
    %v145 = vld [vmem:[#allocation2 + $0x30] sm:$0xff]
    %v146 = vld [vmem:[#allocation2 + $0x38] sm:$0xff]
    %v147 = vld [vmem:[#allocation2 + $0x40] sm:$0xff]
    %v148 = vld [vmem:[#allocation2 + $0x48] sm:$0xff]
    %v149 = vld [vmem:[#allocation2 + $0x50] sm:$0xff]
    %v150 = vld [vmem:[#allocation2 + $0x58] sm:$0xff]
    %v151 = vld [vmem:[#allocation2 + $0x60] sm:$0xff]
    %v152 = vld [vmem:[#allocation2 + $0x68] sm:$0xff]
    %v153 = vld [vmem:[#allocation2 + $0x70] sm:$0xff]
    %v154 = vld [vmem:[#allocation2 + $0x78] sm:$0xff]
    %v155 = vld [vmem:[#allocation2 + $0x80] sm:$0xff]
    %v156 = vld [vmem:[#allocation2 + $0x88] sm:$0xff]
    %v157 = vld [vmem:[#allocation2 + $0x90] sm:$0xff]
    %v158 = vld [vmem:[#allocation2 + $0x98] sm:$0xff]
    %v159 = vld [vmem:[#allocation2 + $0xa0] sm:$0xff]
    %v160 = vld [vmem:[#allocation2 + $0xa8] sm:$0xff]
    %v161 = vld [vmem:[#allocation2 + $0xb0] sm:$0xff]
    %v162 = vld [vmem:[#allocation2 + $0xb8] sm:$0xff]
    %v163 = vld [vmem:[#allocation2 + $0xc0] sm:$0xff]
    %v164 = vld [vmem:[#allocation2 + $0xc8] sm:$0xff]
    %v165 = vld [vmem:[#allocation2 + $0xd0] sm:$0xff]
    %v166 = vld [vmem:[#allocation2 + $0xd8] sm:$0xff]
    %v167 = vld [vmem:[#allocation2 + $0xe0] sm:$0xff]
    %v168 = vld [vmem:[#allocation2 + $0xe8] sm:$0xff]
    %v169 = vld [vmem:[#allocation2 + $0xf0] sm:$0xff]
    %v170 = vld [vmem:[#allocation2 + $0xf8] sm:$0xff]
    %v171 = vld [vmem:[#allocation2 + $0x100] sm:$0xff]
    %v172 = vld [vmem:[#allocation2 + $0x108] sm:$0xff]
    %v173 = vld [vmem:[#allocation2 + $0x110] sm:$0xff]
    %v174 = vld [vmem:[#allocation2 + $0x118] sm:$0xff]
    %v175 = vld [vmem:[#allocation2 + $0x120] sm:$0xff]
    %v176 = vld [vmem:[#allocation2 + $0x128] sm:$0xff]
    %v177 = vld [vmem:[#allocation2 + $0x130] sm:$0xff]
    %v178 = vld [vmem:[#allocation2 + $0x138] sm:$0xff]
    %v179 = vld [vmem:[#allocation2 + $0x140] sm:$0xff]
    %v180 = vld [vmem:[#allocation2 + $0x148] sm:$0xff]
    %v181 = vld [vmem:[#allocation2 + $0x150] sm:$0xff]
    %v182 = vld [vmem:[#allocation2 + $0x158] sm:$0xff]
    %v183 = vld [vmem:[#allocation2 + $0x160] sm:$0xff]
    %v184 = vld [vmem:[#allocation2 + $0x168] sm:$0xff]
    %v185 = vld [vmem:[#allocation2 + $0x170] sm:$0xff]
    %v186 = vld [vmem:[#allocation2 + $0x178] sm:$0xff]
    %v187 = vld [vmem:[#allocation2 + $0x180] sm:$0xff]
    %v188 = vld [vmem:[#allocation2 + $0x188] sm:$0xff]
    %v189 = vld [vmem:[#allocation2 + $0x190] sm:$0xff]
    %v190 = vld [vmem:[#allocation2 + $0x198] sm:$0xff]
    %v191 = vld [vmem:[#allocation2 + $0x1a0] sm:$0xff]
    %v192 = vld [vmem:[#allocation2 + $0x1a8] sm:$0xff]
    %v193 = vld [vmem:[#allocation2 + $0x1b0] sm:$0xff]
    %v194 = vld [vmem:[#allocation2 + $0x1b8] sm:$0xff]
    %v195 = vld [vmem:[#allocation2 + $0x1c0] sm:$0xff]
    %v196 = vld [vmem:[#allocation2 + $0x1c8] sm:$0xff]
    %v197 = vld [vmem:[#allocation2 + $0x1d0] sm:$0xff]
    %v198 = vld [vmem:[#allocation2 + $0x1d8] sm:$0xff]
    %v199 = vld [vmem:[#allocation2 + $0x1e0] sm:$0xff]
    %v200 = vld [vmem:[#allocation2 + $0x1e8] sm:$0xff]
    %v201 = vld [vmem:[#allocation2 + $0x1f0] sm:$0xff]
    %v202 = vld [vmem:[#allocation2 + $0x1f8] sm:$0xff]
    %v203 = vld [vmem:[%s3] sm:$0x3]
    %v205 = vlaneseq
    %v206 = vshrl.u32 %v205, 7
    %v207 = vsub.s32 0, %v206
    %v208 = vrot.slane %v203, %v207
    %v209 = vlaneseq
    %v210 = vshrl.u32 %v209, 7
    %v211 = vsub.s32 1, %v210
    %v212 = vrot.slane %v203, %v211
    %215 = vmatprep.subr.mxu0 %v140
    %216 = vmatpush1.msra.mxu0 %v139
    %217 = vmatprep.subr.mxu0 %v142
    %218 = vmatpush1.msra.mxu0 %v141
    %219 = vmatprep.subr.mxu0 %v144
    %220 = vmatpush1.msra.mxu0 %v143
    %221 = vmatprep.subr.mxu0 %v146
    %222 = vmatpush1.msra.mxu0 %v145
    %223 = vmatprep.subr.mxu0 %v148
    %224 = vmatpush1.msra.mxu0 %v147
    %225 = vmatprep.subr.mxu0 %v150
    %226 = vmatpush1.msra.mxu0 %v149
    %227 = vmatprep.subr.mxu0 %v152
    %228 = vmatpush1.msra.mxu0 %v151
    %229 = vmatprep.subr.mxu0 %v154
    %230 = vmatpush1.msra.mxu0 %v153
    %231 = vmatprep.subr.mxu0 %v156
    %232 = vmatpush1.msra.mxu0 %v155
    %233 = vmatprep.subr.mxu0 %v158
    %234 = vmatpush1.msra.mxu0 %v157
    %235 = vmatprep.subr.mxu0 %v160
    %236 = vmatpush1.msra.mxu0 %v159
    %237 = vmatprep.subr.mxu0 %v162
    %238 = vmatpush1.msra.mxu0 %v161
    %239 = vmatprep.subr.mxu0 %v164
    %240 = vmatpush1.msra.mxu0 %v163
    %241 = vmatprep.subr.mxu0 %v166
    %242 = vmatpush1.msra.mxu0 %v165
    %243 = vmatprep.subr.mxu0 %v168
    %244 = vmatpush1.msra.mxu0 %v167
    %245 = vmatprep.subr.mxu0 %v170
    %246 = vmatpush1.msra.mxu0 %v169
    %247 = vmatprep.subr.mxu0 %v172
    %248 = vmatpush1.msra.mxu0 %v171
    %249 = vmatprep.subr.mxu0 %v174
    %250 = vmatpush1.msra.mxu0 %v173
    %251 = vmatprep.subr.mxu0 %v176
    %252 = vmatpush1.msra.mxu0 %v175
    %253 = vmatprep.subr.mxu0 %v178
    %254 = vmatpush1.msra.mxu0 %v177
    %255 = vmatprep.subr.mxu0 %v180
    %256 = vmatpush1.msra.mxu0 %v179
    %257 = vmatprep.subr.mxu0 %v182
    %258 = vmatpush1.msra.mxu0 %v181
    %259 = vmatprep.subr.mxu0 %v184
    %260 = vmatpush1.msra.mxu0 %v183
    %261 = vmatprep.subr.mxu0 %v186
    %262 = vmatpush1.msra.mxu0 %v185
    %263 = vmatprep.subr.mxu0 %v188
    %264 = vmatpush1.msra.mxu0 %v187
    %265 = vmatprep.subr.mxu0 %v190
    %266 = vmatpush1.msra.mxu0 %v189
    %267 = vmatprep.subr.mxu0 %v192
    %268 = vmatpush1.msra.mxu0 %v191
    %269 = vmatprep.subr.mxu0 %v194
    %270 = vmatpush1.msra.mxu0 %v193
    %271 = vmatprep.subr.mxu0 %v196
    %272 = vmatpush1.msra.mxu0 %v195
    %273 = vmatprep.subr.mxu0 %v198
    %274 = vmatpush1.msra.mxu0 %v197
    %275 = vmatprep.subr.mxu0 %v200
    %276 = vmatpush1.msra.mxu0 %v199
    %277 = vmatprep.subr.mxu0 %v202
    %278 = vmatpush1.msra.mxu0 %v201
    %279 = vmatprep.mubr.f32.mxu0 %v138
    %280 = vmatmul.mubr.f32.gmra.mrb[0].mxu0 %v137
    %v281 = vpop.f32.mrb[0].mxu0
    %v282 = vadd.f32 %v208, %v281
    %v283 = vpop.f32.mrb[0].mxu0
    %v284 = vadd.f32 %v212, %v283
    %285 = vdwg.mxu0
    %v286 = vmul.f32 %v282, 0.01
    %v287 = vmul.f32 %v284, 0.01
    %v288 = vmax.f32 %v282, %v286
    %v289 = vmax.f32 %v284, %v287
    %v290 = vld [vmem:[#allocation4] sm:$0xff]
    %v291 = vld [vmem:[#allocation4 + $0x8] sm:$0xff]
    %v292 = vld [vmem:[#allocation4 + $0x10] sm:$0xff]
    %v293 = vld [vmem:[#allocation4 + $0x18] sm:$0xff]
    %v294 = vld [vmem:[#allocation4 + $0x20] sm:$0xff]
    %v295 = vld [vmem:[#allocation4 + $0x28] sm:$0xff]
    %v296 = vld [vmem:[#allocation4 + $0x30] sm:$0xff]
    %v297 = vld [vmem:[#allocation4 + $0x38] sm:$0xff]
    %v298 = vld [vmem:[#allocation4 + $0x40] sm:$0xff]
    %v299 = vld [vmem:[#allocation4 + $0x48] sm:$0xff]
    %v300 = vld [vmem:[#allocation4 + $0x50] sm:$0xff]
    %v301 = vld [vmem:[#allocation4 + $0x58] sm:$0xff]
    %v302 = vld [vmem:[#allocation4 + $0x60] sm:$0xff]
    %v303 = vld [vmem:[#allocation4 + $0x68] sm:$0xff]
    %v304 = vld [vmem:[#allocation4 + $0x70] sm:$0xff]
    %v305 = vld [vmem:[#allocation4 + $0x78] sm:$0xff]
    %v306 = vld [vmem:[#allocation4 + $0x80] sm:$0xff]
    %v307 = vld [vmem:[#allocation4 + $0x88] sm:$0xff]
    %v308 = vld [vmem:[#allocation4 + $0x90] sm:$0xff]
    %v309 = vld [vmem:[#allocation4 + $0x98] sm:$0xff]
    %v310 = vld [vmem:[#allocation4 + $0xa0] sm:$0xff]
    %v311 = vld [vmem:[#allocation4 + $0xa8] sm:$0xff]
    %v312 = vld [vmem:[#allocation4 + $0xb0] sm:$0xff]
    %v313 = vld [vmem:[#allocation4 + $0xb8] sm:$0xff]
    %v314 = vld [vmem:[#allocation4 + $0xc0] sm:$0xff]
    %v315 = vld [vmem:[#allocation4 + $0xc8] sm:$0xff]
    %v316 = vld [vmem:[#allocation4 + $0xd0] sm:$0xff]
    %v317 = vld [vmem:[#allocation4 + $0xd8] sm:$0xff]
    %v318 = vld [vmem:[#allocation4 + $0xe0] sm:$0xff]
    %v319 = vld [vmem:[#allocation4 + $0xe8] sm:$0xff]
    %v320 = vld [vmem:[#allocation4 + $0xf0] sm:$0xff]
    %v321 = vld [vmem:[#allocation4 + $0xf8] sm:$0xff]
    %v322 = vld [vmem:[#allocation4 + $0x100] sm:$0xff]
    %v323 = vld [vmem:[#allocation4 + $0x108] sm:$0xff]
    %v324 = vld [vmem:[#allocation4 + $0x110] sm:$0xff]
    %v325 = vld [vmem:[#allocation4 + $0x118] sm:$0xff]
    %v326 = vld [vmem:[#allocation4 + $0x120] sm:$0xff]
    %v327 = vld [vmem:[#allocation4 + $0x128] sm:$0xff]
    %v328 = vld [vmem:[#allocation4 + $0x130] sm:$0xff]
    %v329 = vld [vmem:[#allocation4 + $0x138] sm:$0xff]
    %v330 = vld [vmem:[#allocation4 + $0x140] sm:$0xff]
    %v331 = vld [vmem:[#allocation4 + $0x148] sm:$0xff]
    %v332 = vld [vmem:[#allocation4 + $0x150] sm:$0xff]
    %v333 = vld [vmem:[#allocation4 + $0x158] sm:$0xff]
    %v334 = vld [vmem:[#allocation4 + $0x160] sm:$0xff]
    %v335 = vld [vmem:[#allocation4 + $0x168] sm:$0xff]
    %v336 = vld [vmem:[#allocation4 + $0x170] sm:$0xff]
    %v337 = vld [vmem:[#allocation4 + $0x178] sm:$0xff]
    %v338 = vld [vmem:[#allocation4 + $0x180] sm:$0xff]
    %v339 = vld [vmem:[#allocation4 + $0x188] sm:$0xff]
    %v340 = vld [vmem:[#allocation4 + $0x190] sm:$0xff]
    %v341 = vld [vmem:[#allocation4 + $0x198] sm:$0xff]
    %v342 = vld [vmem:[#allocation4 + $0x1a0] sm:$0xff]
    %v343 = vld [vmem:[#allocation4 + $0x1a8] sm:$0xff]
    %v344 = vld [vmem:[#allocation4 + $0x1b0] sm:$0xff]
    %v345 = vld [vmem:[#allocation4 + $0x1b8] sm:$0xff]
    %v346 = vld [vmem:[#allocation4 + $0x1c0] sm:$0xff]
    %v347 = vld [vmem:[#allocation4 + $0x1c8] sm:$0xff]
    %v348 = vld [vmem:[#allocation4 + $0x1d0] sm:$0xff]
    %v349 = vld [vmem:[#allocation4 + $0x1d8] sm:$0xff]
    %v350 = vld [vmem:[#allocation4 + $0x1e0] sm:$0xff]
    %v351 = vld [vmem:[#allocation4 + $0x1e8] sm:$0xff]
    %v352 = vld [vmem:[#allocation4 + $0x1f0] sm:$0xff]
    %v353 = vld [vmem:[#allocation4 + $0x1f8] sm:$0xff]
    %v354 = vld [vmem:[%s5] sm:$0x3]
    %v356 = vlaneseq
    %v357 = vshrl.u32 %v356, 7
    %v358 = vsub.s32 0, %v357
    %v359 = vrot.slane %v354, %v358
    %v360 = vlaneseq
    %v361 = vshrl.u32 %v360, 7
    %v362 = vsub.s32 1, %v361
    %v363 = vrot.slane %v354, %v362
    %366 = vmatprep.subr.mxu0 %v291
    %367 = vmatpush1.msra.mxu0 %v290
    %368 = vmatprep.subr.mxu0 %v293
    %369 = vmatpush1.msra.mxu0 %v292
    %370 = vmatprep.subr.mxu0 %v295
    %371 = vmatpush1.msra.mxu0 %v294
    %372 = vmatprep.subr.mxu0 %v297
    %373 = vmatpush1.msra.mxu0 %v296
    %374 = vmatprep.subr.mxu0 %v299
    %375 = vmatpush1.msra.mxu0 %v298
    %376 = vmatprep.subr.mxu0 %v301
    %377 = vmatpush1.msra.mxu0 %v300
    %378 = vmatprep.subr.mxu0 %v303
    %379 = vmatpush1.msra.mxu0 %v302
    %380 = vmatprep.subr.mxu0 %v305
    %381 = vmatpush1.msra.mxu0 %v304
    %382 = vmatprep.subr.mxu0 %v307
    %383 = vmatpush1.msra.mxu0 %v306
    %384 = vmatprep.subr.mxu0 %v309
    %385 = vmatpush1.msra.mxu0 %v308
    %386 = vmatprep.subr.mxu0 %v311
    %387 = vmatpush1.msra.mxu0 %v310
    %388 = vmatprep.subr.mxu0 %v313
    %389 = vmatpush1.msra.mxu0 %v312
    %390 = vmatprep.subr.mxu0 %v315
    %391 = vmatpush1.msra.mxu0 %v314
    %392 = vmatprep.subr.mxu0 %v317
    %393 = vmatpush1.msra.mxu0 %v316
    %394 = vmatprep.subr.mxu0 %v319
    %395 = vmatpush1.msra.mxu0 %v318
    %396 = vmatprep.subr.mxu0 %v321
    %397 = vmatpush1.msra.mxu0 %v320
    %398 = vmatprep.subr.mxu0 %v323
    %399 = vmatpush1.msra.mxu0 %v322
    %400 = vmatprep.subr.mxu0 %v325
    %401 = vmatpush1.msra.mxu0 %v324
    %402 = vmatprep.subr.mxu0 %v327
    %403 = vmatpush1.msra.mxu0 %v326
    %404 = vmatprep.subr.mxu0 %v329
    %405 = vmatpush1.msra.mxu0 %v328
    %406 = vmatprep.subr.mxu0 %v331
    %407 = vmatpush1.msra.mxu0 %v330
    %408 = vmatprep.subr.mxu0 %v333
    %409 = vmatpush1.msra.mxu0 %v332
    %410 = vmatprep.subr.mxu0 %v335
    %411 = vmatpush1.msra.mxu0 %v334
    %412 = vmatprep.subr.mxu0 %v337
    %413 = vmatpush1.msra.mxu0 %v336
    %414 = vmatprep.subr.mxu0 %v339
    %415 = vmatpush1.msra.mxu0 %v338
    %416 = vmatprep.subr.mxu0 %v341
    %417 = vmatpush1.msra.mxu0 %v340
    %418 = vmatprep.subr.mxu0 %v343
    %419 = vmatpush1.msra.mxu0 %v342
    %420 = vmatprep.subr.mxu0 %v345
    %421 = vmatpush1.msra.mxu0 %v344
    %422 = vmatprep.subr.mxu0 %v347
    %423 = vmatpush1.msra.mxu0 %v346
    %424 = vmatprep.subr.mxu0 %v349
    %425 = vmatpush1.msra.mxu0 %v348
    %426 = vmatprep.subr.mxu0 %v351
    %427 = vmatpush1.msra.mxu0 %v350
    %428 = vmatprep.subr.mxu0 %v353
    %429 = vmatpush1.msra.mxu0 %v352
    %430 = vmatprep.mubr.f32.mxu0 %v289
    %431 = vmatmul.mubr.f32.gmra.mrb[0].mxu0 %v288
    %v432 = vpop.f32.mrb[0].mxu0
    %v433 = vadd.f32 %v359, %v432
    %v434 = vpop.f32.mrb[0].mxu0
    %v435 = vadd.f32 %v363, %v434
    %436 = vdwg.mxu0
    %v437 = vmul.f32 %v433, 0.01
    %v438 = vmul.f32 %v435, 0.01
    %v439 = vmax.f32 %v433, %v437
    %v440 = vmax.f32 %v435, %v438
    %v441 = vld [vmem:[%s6] sm:$0xff]
    %v442 = vld [vmem:[%s6 + $0x8] sm:$0xff]
    %v443 = vld [vmem:[%s6 + $0x10] sm:$0xff]
    %v444 = vld [vmem:[%s6 + $0x18] sm:$0xff]
    %v445 = vld [vmem:[%s6 + $0x20] sm:$0xff]
    %v446 = vld [vmem:[%s6 + $0x28] sm:$0xff]
    %v447 = vld [vmem:[%s6 + $0x30] sm:$0xff]
    %v448 = vld [vmem:[%s6 + $0x38] sm:$0xff]
    %v449 = vld [vmem:[%s6 + $0x40] sm:$0xff]
    %v450 = vld [vmem:[%s6 + $0x48] sm:$0xff]
    %v451 = vld [vmem:[%s6 + $0x50] sm:$0xff]
    %v452 = vld [vmem:[%s6 + $0x58] sm:$0xff]
    %v453 = vld [vmem:[%s6 + $0x60] sm:$0xff]
    %v454 = vld [vmem:[%s6 + $0x68] sm:$0xff]
    %v455 = vld [vmem:[%s6 + $0x70] sm:$0xff]
    %v456 = vld [vmem:[%s6 + $0x78] sm:$0xff]
    %v457 = vld [vmem:[%s6 + $0x80] sm:$0xff]
    %v458 = vld [vmem:[%s6 + $0x88] sm:$0xff]
    %v459 = vld [vmem:[%s6 + $0x90] sm:$0xff]
    %v460 = vld [vmem:[%s6 + $0x98] sm:$0xff]
    %v461 = vld [vmem:[%s6 + $0xa0] sm:$0xff]
    %v462 = vld [vmem:[%s6 + $0xa8] sm:$0xff]
    %v463 = vld [vmem:[%s6 + $0xb0] sm:$0xff]
    %v464 = vld [vmem:[%s6 + $0xb8] sm:$0xff]
    %v465 = vld [vmem:[%s6 + $0xc0] sm:$0xff]
    %v466 = vld [vmem:[%s6 + $0xc8] sm:$0xff]
    %v467 = vld [vmem:[%s6 + $0xd0] sm:$0xff]
    %v468 = vld [vmem:[%s6 + $0xd8] sm:$0xff]
    %v469 = vld [vmem:[%s6 + $0xe0] sm:$0xff]
    %v470 = vld [vmem:[%s6 + $0xe8] sm:$0xff]
    %v471 = vld [vmem:[%s6 + $0xf0] sm:$0xff]
    %v472 = vld [vmem:[%s6 + $0xf8] sm:$0xff]
    %v473 = vld [vmem:[%s7] sm:$0x1]
    %v475 = vlaneseq
    %v476 = vshrl.u32 %v475, 7
    %v477 = vsub.s32 0, %v476
    %v478 = vrot.slane %v473, %v477
    %480 = vmatprep.subr.mxu0 0.0
    %481 = vmatpush1.msra.mxu0 %v441
    %482 = vmatprep.subr.mxu0 0.0
    %483 = vmatpush1.msra.mxu0 %v442
    %484 = vmatprep.subr.mxu0 0.0
    %485 = vmatpush1.msra.mxu0 %v443
    %486 = vmatprep.subr.mxu0 0.0
    %487 = vmatpush1.msra.mxu0 %v444
    %488 = vmatprep.subr.mxu0 0.0
    %489 = vmatpush1.msra.mxu0 %v445
    %490 = vmatprep.subr.mxu0 0.0
    %491 = vmatpush1.msra.mxu0 %v446
    %492 = vmatprep.subr.mxu0 0.0
    %493 = vmatpush1.msra.mxu0 %v447
    %494 = vmatprep.subr.mxu0 0.0
    %495 = vmatpush1.msra.mxu0 %v448
    %496 = vmatprep.subr.mxu0 0.0
    %497 = vmatpush1.msra.mxu0 %v449
    %498 = vmatprep.subr.mxu0 0.0
    %499 = vmatpush1.msra.mxu0 %v450
    %500 = vmatprep.subr.mxu0 0.0
    %501 = vmatpush1.msra.mxu0 %v451
    %502 = vmatprep.subr.mxu0 0.0
    %503 = vmatpush1.msra.mxu0 %v452
    %504 = vmatprep.subr.mxu0 0.0
    %505 = vmatpush1.msra.mxu0 %v453
    %506 = vmatprep.subr.mxu0 0.0
    %507 = vmatpush1.msra.mxu0 %v454
    %508 = vmatprep.subr.mxu0 0.0
    %509 = vmatpush1.msra.mxu0 %v455
    %510 = vmatprep.subr.mxu0 0.0
    %511 = vmatpush1.msra.mxu0 %v456
    %512 = vmatprep.subr.mxu0 0.0
    %513 = vmatpush1.msra.mxu0 %v457
    %514 = vmatprep.subr.mxu0 0.0
    %515 = vmatpush1.msra.mxu0 %v458
    %516 = vmatprep.subr.mxu0 0.0
    %517 = vmatpush1.msra.mxu0 %v459
    %518 = vmatprep.subr.mxu0 0.0
    %519 = vmatpush1.msra.mxu0 %v460
    %520 = vmatprep.subr.mxu0 0.0
    %521 = vmatpush1.msra.mxu0 %v461
    %522 = vmatprep.subr.mxu0 0.0
    %523 = vmatpush1.msra.mxu0 %v462
    %524 = vmatprep.subr.mxu0 0.0
    %525 = vmatpush1.msra.mxu0 %v463
    %526 = vmatprep.subr.mxu0 0.0
    %527 = vmatpush1.msra.mxu0 %v464
    %528 = vmatprep.subr.mxu0 0.0
    %529 = vmatpush1.msra.mxu0 %v465
    %530 = vmatprep.subr.mxu0 0.0
    %531 = vmatpush1.msra.mxu0 %v466
    %532 = vmatprep.subr.mxu0 0.0
    %533 = vmatpush1.msra.mxu0 %v467
    %534 = vmatprep.subr.mxu0 0.0
    %535 = vmatpush1.msra.mxu0 %v468
    %536 = vmatprep.subr.mxu0 0.0
    %537 = vmatpush1.msra.mxu0 %v469
    %538 = vmatprep.subr.mxu0 0.0
    %539 = vmatpush1.msra.mxu0 %v470
    %540 = vmatprep.subr.mxu0 0.0
    %541 = vmatpush1.msra.mxu0 %v471
    %542 = vmatprep.subr.mxu0 0.0
    %543 = vmatpush1.msra.mxu0 %v472
    %544 = vmatprep.mubr.f32.mxu0 %v440
    %545 = vmatmul.mubr.f32.gmra.mrb[0].mxu0 %v439
    %v546 = vpop.f32.mrb[0].mxu0
    %v547 = vadd.f32 %v478, %v546
    %v548 = vpop.f32.mrb[0].mxu0
    %549 = vdwg.mxu0
    %v550 = vlaneseq
    %v551 = vand.u32 %v550, 127
    %vm552 = vcmp.lt.s32.totalorder %v551, 4
    %v553 = vadd.f32 %v547, %v57
    %v554 = vsel %vm552, %v553, 0.0
    %v555 = vmul.f32 %v554, %v554
    %v556 = vsel %vm60, %v555, 0.0
    %557 = vadd.xlane.f32.xlu0 %v556
    %v558 = vpop.xlane.xlu0 %557
    %v559 = vadd.f32 %v558, 1e-12
    %v560 = vrsqrt.pop %v559
    %v561 = vmul.f32 %v554, %v560
    %v562 = vmax.f32 %v547, 0.0
    %vm563 = vcmp.ne.f32.partialorder %v547, %v547
    %v564 = vadd.f32 %v547, 0.0
    %v565 = vand.u32 2147483647, %v547
    %v566 = vsub.f32 0.0, %v565
    %v567 = vmul.f32 %v566, 1.442695
    %v568 = vpow.pop %v567
    %v569 = vadd.f32 %v568, 1.0
    %v570 = vlog2.pop %v569
    %v571 = vmul.f32 %v570, 0.6931472
    %v572 = vmul.f32 -0.5, %v568
    %v573 = vadd.f32 %v572, 1.0
    %v574 = vmul.f32 %v573, %v568
    %v575 = vand.u32 2147483647, %v568
    %vm576 = vcmp.lt.f32.partialorder %v575, 0.0004427343
    %v577 = vsel %vm576, %v574, %v571
    %v578 = vadd.f32 %v562, %v577
    %v579 = vsel %vm563, %v564, %v578
    %v580 = vadd.f32 %v579, 0.001
    %vm581 = vcmp.eq.s32.totalorder %v551, 4
    %v582 = vsel %vm581, %v580, 0.0
    %v583 = vadd.f32 %v561, %v582
    %584 = vst.msk [vmem:[%s8] sm:$0xff] %vm60, %v583
    // Predicated region
    $region42: #{simple_mlp_forward.1} parent=1 // pred_check
      _
    $region43: #{simple_mlp_forward.1} parent=1 // pred_check_branch
      %586 = sbr.rel (0) target = $region45
    $region44: #{simple_mlp_forward.1} parent=1 // pred_region
      _
    $region45: #{simple_mlp_forward.1} parent=1 // pred_fallthru
      _
    // Predicated region
    $region46: #{simple_mlp_forward.1} parent=1 // pred_check
      _
    $region47: #{simple_mlp_forward.1} parent=1 // pred_check_branch
      %588 = sbr.rel (0) target = $region49
    $region48: #{simple_mlp_forward.1} parent=1 // pred_region
      _
    $region49: #{simple_mlp_forward.1} parent=1 // pred_fallthru
      _
    %589 = vsyncpa [#allocation3], 1
    %590 = vsyncpa [#allocation5], 1

</llo_original>
